<compile_context>
chip_gen: v7x
topology: tpu7x:2x2x1
jax: 0.10.0
libtpu: 0.0.40
codegen_flags: <defaults>
</compile_context>

<pallas_src>
import functools

import jax
import jax.numpy as jnp
from jax.experimental import pallas as pl
from jax.experimental.pallas import tpu as pltpu


def _round_up(n, m):
    return ((n + m - 1) // m) * m


def _mlp_kernel(x_ref, w1_ref, b1_ref, w2_ref, b2_ref, w3_ref, b3_ref, o_ref):
    # In-kernel cast of x to the MXU compute dtype (free on the VPU, no extra
    # HBM pass).  Accumulation, bias-add and tanh stay in f32 (VPU/EUP path).
    x = x_ref[...].astype(w1_ref.dtype)
    h1 = jnp.tanh(
        jnp.dot(x, w1_ref[...], preferred_element_type=jnp.float32) + b1_ref[...]
    )
    h2 = jnp.tanh(
        jnp.dot(h1.astype(w2_ref.dtype), w2_ref[...],
                preferred_element_type=jnp.float32) + b2_ref[...]
    )
    out = jnp.tanh(
        jnp.dot(h2.astype(w3_ref.dtype), w3_ref[...],
                preferred_element_type=jnp.float32) + b3_ref[...]
    )
    o_ref[...] = out.astype(o_ref.dtype)


@functools.partial(jax.jit, static_argnames=("block_b", "compute_dtype"))
def policy_forward(x, w1, b1, w2, b2, w3, b3, *, block_b=4096,
                   compute_dtype=jnp.bfloat16):
    B, obs_dim = x.shape
    act_dim = w3.shape[1]

    # Batch tile: multiple of 16 (bf16 sublane packing).  Aim for >=2 grid
    # steps so v7x's two TensorCores both get work (harmless on v5e/v6e),
    # capped at block_b so huge batches still pipeline in modest VMEM.
    half = -(-B // 2)  # cdiv(B, 2)
    tb = min(block_b, max(16, _round_up(half, 16)))
    b_pad = _round_up(B, tb)
    # Only the (cheap, f32) batch pad stays in the wrapper; no dtype cast here.
    xp = x if b_pad == B else jnp.pad(x, ((0, b_pad - B), (0, 0)))

    # Weights in the MXU compute dtype (tiny, one-time); biases stay f32.
    w1c = w1.astype(compute_dtype)
    w2c = w2.astype(compute_dtype)
    w3c = w3.astype(compute_dtype)

    def resident(shape):
        # Grid-invariant full-array block: constant index_map keeps it
        # VMEM-resident across batch tiles (no per-step re-DMA).
        return pl.BlockSpec(shape, lambda i: (0,) * len(shape))

    out = pl.pallas_call(
        _mlp_kernel,
        out_shape=jax.ShapeDtypeStruct((b_pad, act_dim), jnp.float32),
        grid=(b_pad // tb,),
        in_specs=[
            pl.BlockSpec((tb, obs_dim), lambda i: (i, 0)),   # batch-tiled f32 x
            resident(w1c.shape),
            resident(b1.shape),
            resident(w2c.shape),
            resident(b2.shape),
            resident(w3c.shape),
            resident(b3.shape),
        ],
        out_specs=pl.BlockSpec((tb, act_dim), lambda i: (i, 0)),
        compiler_params=pltpu.CompilerParams(
            # v7x: shard the batch grid over both TensorCores.
            dimension_semantics=("parallel",),
        ),
    )(xp, w1c, b1, w2c, b2, w3c, b3)

    # Strip only the batch padding (no lane slab to slice anymore).
    return out if b_pad == B else out[:B]


def _orthogonal(key, shape, gain):
    # Deterministic orthogonal init (mirrors torch.nn.init.orthogonal_ semantics).
    rows, cols = shape
    flat = jax.random.normal(key, (max(rows, cols), min(rows, cols)), jnp.float32)
    q, r = jnp.linalg.qr(flat)
    q = q * jnp.sign(jnp.diagonal(r))
    if rows < cols:
        q = q.T
    return gain * q[:rows, :cols]


def init_params(key, obs_dim, hidden, act_dim):
    k1, k1b, k2, k3 = jax.random.split(key, 4)
    # l1: torch default Linear init: weight AND bias ~ U(+-1/sqrt(fan_in)).
    bound = 1.0 / jnp.sqrt(obs_dim)
    w1 = jax.random.uniform(k1, (obs_dim, hidden), jnp.float32, -bound, bound)
    b1 = jax.random.uniform(k1b, (1, hidden), jnp.float32, -bound, bound)
    # l3: orthogonal(std=sqrt(2)), bias 0   (stored transposed: (in, out))
    w2 = _orthogonal(k2, (hidden, hidden), jnp.sqrt(2.0)).astype(jnp.float32)
    b2 = jnp.zeros((1, hidden), jnp.float32)
    # l5: orthogonal(std=0.01), bias 0
    w3 = _orthogonal(k3, (act_dim, hidden), 0.01).T.astype(jnp.float32)
    b3 = jnp.zeros((1, act_dim), jnp.float32)
    # actor_logstd exists on the module but is not used by forward()
    actor_logstd = jnp.full((act_dim,), jnp.log(0.9), jnp.float32)
    return (w1, b1, w2, b2, w3, b3), actor_logstd


def reference_forward(x, params):
    w1, b1, w2, b2, w3, b3 = params
    h = jnp.tanh(x @ w1 + b1)
    h = jnp.tanh(h @ w2 + b2)
    return jnp.tanh(h @ w3 + b3)


if __name__ == "__main__":
    OBS, HID, ACT = 8, 64, 4
    key = jax.random.PRNGKey(0)
    kx1, kx2, kp = jax.random.split(key, 3)
    params, actor_logstd = init_params(kp, OBS, HID, ACT)

    # --- case 1: tiny batch (single grid step), f32 MXU path, tight tolerance
    x_small = jax.random.normal(kx1, (8, OBS), jnp.float32)
    out_f32 = jax.block_until_ready(
        policy_forward(x_small, *params, compute_dtype=jnp.float32))
    ref_small = reference_forward(x_small, params)
    assert out_f32.shape == (8, ACT)
    assert jnp.allclose(out_f32, ref_small, atol=1e-5, rtol=1e-5), "f32 mismatch"

    # --- case 2: batch not a tile multiple (exercises >=2 grid steps, batch
    #             padding, resident weights), default bf16 MXU path.
    x_big = jax.random.normal(kx2, (100, OBS), jnp.float32)
    out_bf16 = jax.block_until_ready(policy_forward(x_big, *params))
    ref_big = reference_forward(x_big, params)
    assert out_bf16.shape == (100, ACT)
    assert jnp.allclose(out_bf16, ref_big, atol=2e-2, rtol=2e-2), "bf16 mismatch"

    # --- case 3: forced small tile (multi-step grid with block_b cap), bf16
    out_tiled = jax.block_until_ready(policy_forward(x_big, *params, block_b=32))
    assert out_tiled.shape == (100, ACT)
    assert jnp.allclose(out_tiled, ref_big, atol=2e-2, rtol=2e-2), "tiled mismatch"

    print("KERNEL_OK")
</pallas_src>

<mosaic_0001>
module attributes {stable_mosaic.version = 11 : i64} {
  func.func @_mlp_kernel(%arg0: i32, %arg1: memref<16x8xf32, #tpu.memory_space<vmem>>, %arg2: memref<8x64xf32, #tpu.memory_space<vmem>>, %arg3: memref<1x64xf32, #tpu.memory_space<vmem>>, %arg4: memref<64x64xf32, #tpu.memory_space<vmem>>, %arg5: memref<1x64xf32, #tpu.memory_space<vmem>>, %arg6: memref<64x4xf32, #tpu.memory_space<vmem>>, %arg7: memref<1x4xf32, #tpu.memory_space<vmem>>, %arg8: memref<16x4xf32, #tpu.memory_space<vmem>>) attributes {dimension_semantics = [#tpu.dimension_semantics<parallel>], iteration_bounds = array<i64: 1>, scalar_prefetch = 0 : i64, scratch_operands = 0 : i64, tpu.core_type = #tpu.core_type<tc>, window_params = [{transform_indices = @transform_0, window_bounds = array<i64: 16, 8>}, {pipeline_mode = #tpu.pipeline_mode<synchronous>, transform_indices = @transform_1, window_bounds = array<i64: 8, 64>}, {pipeline_mode = #tpu.pipeline_mode<synchronous>, transform_indices = @transform_2, window_bounds = array<i64: 1, 64>}, {pipeline_mode = #tpu.pipeline_mode<synchronous>, transform_indices = @transform_3, window_bounds = array<i64: 64, 64>}, {pipeline_mode = #tpu.pipeline_mode<synchronous>, transform_indices = @transform_4, window_bounds = array<i64: 1, 64>}, {pipeline_mode = #tpu.pipeline_mode<synchronous>, transform_indices = @transform_5, window_bounds = array<i64: 64, 4>}, {pipeline_mode = #tpu.pipeline_mode<synchronous>, transform_indices = @transform_6, window_bounds = array<i64: 1, 4>}, {transform_indices = @transform_7, window_bounds = array<i64: 16, 4>}]} {
    %c0 = arith.constant 0 : index
    %c0_0 = arith.constant 0 : index
    %0 = vector.load %arg1[%c0, %c0_0] : memref<16x8xf32, #tpu.memory_space<vmem>>, vector<16x8xf32>
    %c0_1 = arith.constant 0 : index
    %c0_2 = arith.constant 0 : index
    %1 = vector.load %arg2[%c0_1, %c0_2] : memref<8x64xf32, #tpu.memory_space<vmem>>, vector<8x64xf32>
    %cst = arith.constant dense<0.000000e+00> : vector<16x64xf32>
    %2 = tpu.matmul %0, %1, %cst {dimension_numbers = #tpu.dot_dimension_numbers<[1], [0], [0], [1], [0, 0, 1, 1], [], []>} : vector<16x8xf32>, vector<8x64xf32>, vector<16x64xf32> -> vector<16x64xf32>
    %c0_3 = arith.constant 0 : index
    %c0_4 = arith.constant 0 : index
    %3 = vector.load %arg3[%c0_3, %c0_4] : memref<1x64xf32, #tpu.memory_space<vmem>>, vector<1x64xf32>
    %4 = vector.broadcast %3 : vector<1x64xf32> to vector<16x64xf32>
    %5 = arith.addf %2, %4 : vector<16x64xf32>
    %6 = math.tanh %5 : vector<16x64xf32>
    %c0_5 = arith.constant 0 : index
    %c0_6 = arith.constant 0 : index
    %7 = vector.load %arg4[%c0_5, %c0_6] : memref<64x64xf32, #tpu.memory_space<vmem>>, vector<64x64xf32>
    %cst_7 = arith.constant dense<0.000000e+00> : vector<16x64xf32>
    %8 = tpu.matmul %6, %7, %cst_7 {dimension_numbers = #tpu.dot_dimension_numbers<[1], [0], [0], [1], [0, 0, 1, 1], [], []>} : vector<16x64xf32>, vector<64x64xf32>, vector<16x64xf32> -> vector<16x64xf32>
    %c0_8 = arith.constant 0 : index
    %c0_9 = arith.constant 0 : index
    %9 = vector.load %arg5[%c0_8, %c0_9] : memref<1x64xf32, #tpu.memory_space<vmem>>, vector<1x64xf32>
    %10 = vector.broadcast %9 : vector<1x64xf32> to vector<16x64xf32>
    %11 = arith.addf %8, %10 : vector<16x64xf32>
    %12 = math.tanh %11 : vector<16x64xf32>
    %c0_10 = arith.constant 0 : index
    %c0_11 = arith.constant 0 : index
    %13 = vector.load %arg6[%c0_10, %c0_11] : memref<64x4xf32, #tpu.memory_space<vmem>>, vector<64x4xf32>
    %cst_12 = arith.constant dense<0.000000e+00> : vector<16x4xf32>
    %14 = tpu.matmul %12, %13, %cst_12 {dimension_numbers = #tpu.dot_dimension_numbers<[1], [0], [0], [1], [0, 0, 1, 1], [], []>} : vector<16x64xf32>, vector<64x4xf32>, vector<16x4xf32> -> vector<16x4xf32>
    %c0_13 = arith.constant 0 : index
    %c0_14 = arith.constant 0 : index
    %15 = vector.load %arg7[%c0_13, %c0_14] : memref<1x4xf32, #tpu.memory_space<vmem>>, vector<1x4xf32>
    %16 = vector.broadcast %15 : vector<1x4xf32> to vector<16x4xf32>
    %17 = arith.addf %14, %16 : vector<16x4xf32>
    %18 = math.tanh %17 : vector<16x4xf32>
    %c0_15 = arith.constant 0 : index
    %c0_16 = arith.constant 0 : index
    %19 = vector.load %arg8[%c0_15, %c0_16] : memref<16x4xf32, #tpu.memory_space<vmem>>, vector<16x4xf32>
    tpu.vector_store %arg8[%c0_15, %c0_16], %18 {strides = array<i32>} : memref<16x4xf32, #tpu.memory_space<vmem>>, vector<16x4xf32>,
    return
  }
  func.func @transform_0(%arg0: i32) -> (i32, i32) {
    %c0_i32 = arith.constant 0 : i32
    %c0_i32_0 = arith.constant 0 : i32
    return %arg0, %c0_i32 : i32, i32
  }
  func.func @transform_1(%arg0: i32) -> (i32, i32) {
    %c0_i32 = arith.constant 0 : i32
    %c0_i32_0 = arith.constant 0 : i32
    %c0_i32_1 = arith.constant 0 : i32
    return %c0_i32, %c0_i32_0 : i32, i32
  }
  func.func @transform_2(%arg0: i32) -> (i32, i32) {
    %c0_i32 = arith.constant 0 : i32
    %c0_i32_0 = arith.constant 0 : i32
    %c0_i32_1 = arith.constant 0 : i32
    return %c0_i32, %c0_i32_0 : i32, i32
  }
  func.func @transform_3(%arg0: i32) -> (i32, i32) {
    %c0_i32 = arith.constant 0 : i32
    %c0_i32_0 = arith.constant 0 : i32
    %c0_i32_1 = arith.constant 0 : i32
    return %c0_i32, %c0_i32_0 : i32, i32
  }
  func.func @transform_4(%arg0: i32) -> (i32, i32) {
    %c0_i32 = arith.constant 0 : i32
    %c0_i32_0 = arith.constant 0 : i32
    %c0_i32_1 = arith.constant 0 : i32
    return %c0_i32, %c0_i32_0 : i32, i32
  }
  func.func @transform_5(%arg0: i32) -> (i32, i32) {
    %c0_i32 = arith.constant 0 : i32
    %c0_i32_0 = arith.constant 0 : i32
    %c0_i32_1 = arith.constant 0 : i32
    return %c0_i32, %c0_i32_0 : i32, i32
  }
  func.func @transform_6(%arg0: i32) -> (i32, i32) {
    %c0_i32 = arith.constant 0 : i32
    %c0_i32_0 = arith.constant 0 : i32
    %c0_i32_1 = arith.constant 0 : i32
    return %c0_i32, %c0_i32_0 : i32, i32
  }
  func.func @transform_7(%arg0: i32) -> (i32, i32) {
    %c0_i32 = arith.constant 0 : i32
    %c0_i32_0 = arith.constant 0 : i32
    return %arg0, %c0_i32 : i32, i32
  }
}

</mosaic_0001>

<llo_original>
// kernel: policy_forward.1
$region0: #{policy_forward.1}
  #allocation0 [shape = 'u32[]', space=smem, size = 0x4, offset = 0x4, fixed_abs, tag = 'smem constant byte address 0x4 - core index']
  #allocation1 [shape = 'u32[144,128]{1,0:T(1,128)}', space=vmem, size = 0x12000, scoped, tag = 'internal scratch']
  %s0 = inlined_call_operand.vmem [shape: f32[16,8], index: 0, kind: input, shape index: {}]
  %s1 = inlined_call_operand.vmem [shape: f32[8,64], index: 1, kind: input, shape index: {}]
  %s2 = inlined_call_operand.vmem [shape: f32[1,64], index: 2, kind: input, shape index: {}]
  %s3 = inlined_call_operand.vmem [shape: f32[64,64], index: 3, kind: input, shape index: {}]
  %s4 = inlined_call_operand.vmem [shape: f32[1,64], index: 4, kind: input, shape index: {}]
  %s5 = inlined_call_operand.vmem [shape: f32[64,4], index: 5, kind: input, shape index: {}]
  %s6 = inlined_call_operand.vmem [shape: f32[1,4], index: 6, kind: input, shape index: {}]
  %s7 = inlined_call_operand.vmem [shape: f32[16,4], index: 7, kind: output, shape index: {}]
  %s8 = sld [smem:[#allocation0]]
  $region38: #{policy_forward.1} parent=0
    _
  %s10 = ssub.s32 1, %s8
  %s11 = scalar_select 0, %s10, %s8
  // Predicated region
  $region2: #{policy_forward.1} parent=0 // pred_check
    _
  $region3: #{policy_forward.1} parent=0 // pred_check_branch
    %13 = sbr.rel (0) target = $region5
  $region4: #{policy_forward.1} parent=0 // pred_region
    _
  $region5: #{policy_forward.1} parent=0 // pred_fallthru
    _
  // Predicated region
  $region6: #{policy_forward.1} parent=0 // pred_check
    _
  $region7: #{policy_forward.1} parent=0 // pred_check_branch
    %15 = sbr.rel (0) target = $region9
  $region8: #{policy_forward.1} parent=0 // pred_region
    _
  $region9: #{policy_forward.1} parent=0 // pred_fallthru
    _
  // Predicated region
  $region10: #{policy_forward.1} parent=0 // pred_check
    _
  $region11: #{policy_forward.1} parent=0 // pred_check_branch
    %17 = sbr.rel (0) target = $region13
  $region12: #{policy_forward.1} parent=0 // pred_region
    _
  $region13: #{policy_forward.1} parent=0 // pred_fallthru
    _
  // Predicated region
  $region14: #{policy_forward.1} parent=0 // pred_check
    _
  $region15: #{policy_forward.1} parent=0 // pred_check_branch
    %19 = sbr.rel (0) target = $region17
  $region16: #{policy_forward.1} parent=0 // pred_region
    _
  $region17: #{policy_forward.1} parent=0 // pred_fallthru
    _
  // Predicated region
  $region18: #{policy_forward.1} parent=0 // pred_check
    _
  $region19: #{policy_forward.1} parent=0 // pred_check_branch
    %21 = sbr.rel (0) target = $region21
  $region20: #{policy_forward.1} parent=0 // pred_region
    _
  $region21: #{policy_forward.1} parent=0 // pred_fallthru
    _
  // Predicated region
  $region22: #{policy_forward.1} parent=0 // pred_check
    _
  $region23: #{policy_forward.1} parent=0 // pred_check_branch
    %23 = sbr.rel (0) target = $region25
  $region24: #{policy_forward.1} parent=0 // pred_region
    _
  $region25: #{policy_forward.1} parent=0 // pred_fallthru
    _
  // Predicated region
  $region26: #{policy_forward.1} parent=0 // pred_check
    _
  $region27: #{policy_forward.1} parent=0 // pred_check_branch
    %25 = sbr.rel (0) target = $region29
  $region28: #{policy_forward.1} parent=0 // pred_region
    _
  $region29: #{policy_forward.1} parent=0 // pred_fallthru
    _
  %v26 = vld [vmem:[%s0] sm:$0xff]
  %v27 = vld [vmem:[%s0 + $0x8] sm:$0xff]
  %v28 = vld [vmem:[%s1] sm:$0xff]
  %v29 = vld [vmem:[%s2] sm:$0x1]
  %v31 = vlaneseq
  %v32 = vshrl.u32 %v31, 7
  %v33 = vsub.s32 0, %v32
  %v34 = vrot.slane %v29, %v33
  %vm36 = vcmask 64512
  %v38 = vsel %vm36, %v26, 0
  %v41 = vsel %vm36, %v27, 0
  %43 = vmatprep.subr.mxu0 0.0
  %44 = vmatpush1.msra.mxu0 %v28
  %45 = vmatprep.subr.mxu0 0.0
  %46 = vmatpush1.msra.mxu0 0.0
  %47 = vmatprep.subr.mxu0 0.0
  %48 = vmatpush1.msra.mxu0 0.0
  %49 = vmatprep.subr.mxu0 0.0
  %50 = vmatpush1.msra.mxu0 0.0
  %51 = vmatprep.subr.mxu0 0.0
  %52 = vmatpush1.msra.mxu0 0.0
  %53 = vmatprep.subr.mxu0 0.0
  %54 = vmatpush1.msra.mxu0 0.0
  %55 = vmatprep.subr.mxu0 0.0
  %56 = vmatpush1.msra.mxu0 0.0
  %57 = vmatprep.subr.mxu0 0.0
  %58 = vmatpush1.msra.mxu0 0.0
  %59 = vmatprep.subr.mxu0 0.0
  %60 = vmatpush1.msra.mxu0 0.0
  %61 = vmatprep.subr.mxu0 0.0
  %62 = vmatpush1.msra.mxu0 0.0
  %63 = vmatprep.subr.mxu0 0.0
  %64 = vmatpush1.msra.mxu0 0.0
  %65 = vmatprep.subr.mxu0 0.0
  %66 = vmatpush1.msra.mxu0 0.0
  %67 = vmatprep.subr.mxu0 0.0
  %68 = vmatpush1.msra.mxu0 0.0
  %69 = vmatprep.subr.mxu0 0.0
  %70 = vmatpush1.msra.mxu0 0.0
  %71 = vmatprep.subr.mxu0 0.0
  %72 = vmatpush1.msra.mxu0 0.0
  %73 = vmatprep.subr.mxu0 0.0
  %74 = vmatpush1.msra.mxu0 0.0
  %75 = vmatprep.subr.mxu0 0.0
  %76 = vmatpush1.msra.mxu0 0.0
  %77 = vmatprep.subr.mxu0 0.0
  %78 = vmatpush1.msra.mxu0 0.0
  %79 = vmatprep.subr.mxu0 0.0
  %80 = vmatpush1.msra.mxu0 0.0
  %81 = vmatprep.subr.mxu0 0.0
  %82 = vmatpush1.msra.mxu0 0.0
  %83 = vmatprep.subr.mxu0 0.0
  %84 = vmatpush1.msra.mxu0 0.0
  %85 = vmatprep.subr.mxu0 0.0
  %86 = vmatpush1.msra.mxu0 0.0
  %87 = vmatprep.subr.mxu0 0.0
  %88 = vmatpush1.msra.mxu0 0.0
  %89 = vmatprep.subr.mxu0 0.0
  %90 = vmatpush1.msra.mxu0 0.0
  %91 = vmatprep.subr.mxu0 0.0
  %92 = vmatpush1.msra.mxu0 0.0
  %93 = vmatprep.subr.mxu0 0.0
  %94 = vmatpush1.msra.mxu0 0.0
  %95 = vmatprep.subr.mxu0 0.0
  %96 = vmatpush1.msra.mxu0 0.0
  %97 = vmatprep.subr.mxu0 0.0
  %98 = vmatpush1.msra.mxu0 0.0
  %99 = vmatprep.subr.mxu0 0.0
  %100 = vmatpush1.msra.mxu0 0.0
  %101 = vmatprep.subr.mxu0 0.0
  %102 = vmatpush1.msra.mxu0 0.0
  %103 = vmatprep.subr.mxu0 0.0
  %104 = vmatpush1.msra.mxu0 0.0
  %105 = vmatprep.subr.mxu0 0.0
  %106 = vmatpush1.msra.mxu0 0.0
  %107 = vmatprep.mubr.f32.mxu0 0.0
  %108 = vmatmul.mubr.f32.gmra.mrb[0].mxu0 %v38
  %v109 = vpop.f32.mrb[0].mxu0
  %v110 = vadd.f32 %v34, %v109
  %v111 = vpop.f32.mrb[0].mxu0
  %112 = vmatprep.mubr.f32.mxu0 0.0
  %113 = vmatmul.mubr.f32.gmra.mrb[0].mxu0 %v41
  %v114 = vpop.f32.mrb[0].mxu0
  %v115 = vadd.f32 %v34, %v114
  %v116 = vpop.f32.mrb[0].mxu0
  %117 = vdwg.mxu0
  %v118 = vtanh.pop %v110
  %v119 = vtanh.pop %v115
  %v120 = vld [vmem:[%s3] sm:$0xff]
  %v121 = vld [vmem:[%s3 + $0x8] sm:$0xff]
  %v122 = vld [vmem:[%s3 + $0x10] sm:$0xff]
  %v123 = vld [vmem:[%s3 + $0x18] sm:$0xff]
  %v124 = vld [vmem:[%s3 + $0x20] sm:$0xff]
  %v125 = vld [vmem:[%s3 + $0x28] sm:$0xff]
  %v126 = vld [vmem:[%s3 + $0x30] sm:$0xff]
  %v127 = vld [vmem:[%s3 + $0x38] sm:$0xff]
  %v128 = vld [vmem:[%s4] sm:$0x1]
  %v130 = vlaneseq
  %v131 = vshrl.u32 %v130, 7
  %v132 = vsub.s32 0, %v131
  %v133 = vrot.slane %v128, %v132
  %vm135 = vcmask 523264
  %v137 = vsel %vm135, %v118, 0
  %v140 = vsel %vm135, %v119, 0
  %142 = vmatprep.subr.mxu0 0.0
  %143 = vmatpush1.msra.mxu0 %v120
  %144 = vmatprep.subr.mxu0 0.0
  %145 = vmatpush1.msra.mxu0 %v121
  %146 = vmatprep.subr.mxu0 0.0
  %147 = vmatpush1.msra.mxu0 %v122
  %148 = vmatprep.subr.mxu0 0.0
  %149 = vmatpush1.msra.mxu0 %v123
  %150 = vmatprep.subr.mxu0 0.0
  %151 = vmatpush1.msra.mxu0 %v124
  %152 = vmatprep.subr.mxu0 0.0
  %153 = vmatpush1.msra.mxu0 %v125
  %154 = vmatprep.subr.mxu0 0.0
  %155 = vmatpush1.msra.mxu0 %v126
  %156 = vmatprep.subr.mxu0 0.0
  %157 = vmatpush1.msra.mxu0 %v127
  %158 = vmatprep.subr.mxu0 0.0
  %159 = vmatpush1.msra.mxu0 0.0
  %160 = vmatprep.subr.mxu0 0.0
  %161 = vmatpush1.msra.mxu0 0.0
  %162 = vmatprep.subr.mxu0 0.0
  %163 = vmatpush1.msra.mxu0 0.0
  %164 = vmatprep.subr.mxu0 0.0
  %165 = vmatpush1.msra.mxu0 0.0
  %166 = vmatprep.subr.mxu0 0.0
  %167 = vmatpush1.msra.mxu0 0.0
  %168 = vmatprep.subr.mxu0 0.0
  %169 = vmatpush1.msra.mxu0 0.0
  %170 = vmatprep.subr.mxu0 0.0
  %171 = vmatpush1.msra.mxu0 0.0
  %172 = vmatprep.subr.mxu0 0.0
  %173 = vmatpush1.msra.mxu0 0.0
  %174 = vmatprep.subr.mxu0 0.0
  %175 = vmatpush1.msra.mxu0 0.0
  %176 = vmatprep.subr.mxu0 0.0
  %177 = vmatpush1.msra.mxu0 0.0
  %178 = vmatprep.subr.mxu0 0.0
  %179 = vmatpush1.msra.mxu0 0.0
  %180 = vmatprep.subr.mxu0 0.0
  %181 = vmatpush1.msra.mxu0 0.0
  %182 = vmatprep.subr.mxu0 0.0
  %183 = vmatpush1.msra.mxu0 0.0
  %184 = vmatprep.subr.mxu0 0.0
  %185 = vmatpush1.msra.mxu0 0.0
  %186 = vmatprep.subr.mxu0 0.0
  %187 = vmatpush1.msra.mxu0 0.0
  %188 = vmatprep.subr.mxu0 0.0
  %189 = vmatpush1.msra.mxu0 0.0
  %190 = vmatprep.subr.mxu0 0.0
  %191 = vmatpush1.msra.mxu0 0.0
  %192 = vmatprep.subr.mxu0 0.0
  %193 = vmatpush1.msra.mxu0 0.0
  %194 = vmatprep.subr.mxu0 0.0
  %195 = vmatpush1.msra.mxu0 0.0
  %196 = vmatprep.subr.mxu0 0.0
  %197 = vmatpush1.msra.mxu0 0.0
  %198 = vmatprep.subr.mxu0 0.0
  %199 = vmatpush1.msra.mxu0 0.0
  %200 = vmatprep.subr.mxu0 0.0
  %201 = vmatpush1.msra.mxu0 0.0
  %202 = vmatprep.subr.mxu0 0.0
  %203 = vmatpush1.msra.mxu0 0.0
  %204 = vmatprep.subr.mxu0 0.0
  %205 = vmatpush1.msra.mxu0 0.0
  %206 = vmatprep.mubr.f32.mxu0 0.0
  %207 = vmatmul.mubr.f32.gmra.mrb[0].mxu0 %v137
  %v208 = vpop.f32.mrb[0].mxu0
  %v209 = vadd.f32 %v133, %v208
  %v210 = vpop.f32.mrb[0].mxu0
  %211 = vmatprep.mubr.f32.mxu0 0.0
  %212 = vmatmul.mubr.f32.gmra.mrb[0].mxu0 %v140
  %v213 = vpop.f32.mrb[0].mxu0
  %v214 = vadd.f32 %v133, %v213
  %v215 = vpop.f32.mrb[0].mxu0
  %216 = vdwg.mxu0
  %v217 = vtanh.pop %v209
  %v218 = vtanh.pop %v214
  %v219 = vld [vmem:[%s5] sm:$0xff]
  %v220 = vld [vmem:[%s5 + $0x8] sm:$0xff]
  %v221 = vld [vmem:[%s5 + $0x10] sm:$0xff]
  %v222 = vld [vmem:[%s5 + $0x18] sm:$0xff]
  %v223 = vld [vmem:[%s5 + $0x20] sm:$0xff]
  %v224 = vld [vmem:[%s5 + $0x28] sm:$0xff]
  %v225 = vld [vmem:[%s5 + $0x30] sm:$0xff]
  %v226 = vld [vmem:[%s5 + $0x38] sm:$0xff]
  %v227 = vld [vmem:[%s6] sm:$0x1]
  %v229 = vlaneseq
  %v230 = vshrl.u32 %v229, 7
  %v231 = vsub.s32 0, %v230
  %v232 = vrot.slane %v227, %v231
  %v235 = vsel %vm135, %v217, 0
  %v238 = vsel %vm135, %v218, 0
  %240 = vmatprep.subr.mxu0 0.0
  %241 = vmatpush1.msra.mxu0 %v219
  %242 = vmatprep.subr.mxu0 0.0
  %243 = vmatpush1.msra.mxu0 %v220
  %244 = vmatprep.subr.mxu0 0.0
  %245 = vmatpush1.msra.mxu0 %v221
  %246 = vmatprep.subr.mxu0 0.0
  %247 = vmatpush1.msra.mxu0 %v222
  %248 = vmatprep.subr.mxu0 0.0
  %249 = vmatpush1.msra.mxu0 %v223
  %250 = vmatprep.subr.mxu0 0.0
  %251 = vmatpush1.msra.mxu0 %v224
  %252 = vmatprep.subr.mxu0 0.0
  %253 = vmatpush1.msra.mxu0 %v225
  %254 = vmatprep.subr.mxu0 0.0
  %255 = vmatpush1.msra.mxu0 %v226
  %256 = vmatprep.subr.mxu0 0.0
  %257 = vmatpush1.msra.mxu0 0.0
  %258 = vmatprep.subr.mxu0 0.0
  %259 = vmatpush1.msra.mxu0 0.0
  %260 = vmatprep.subr.mxu0 0.0
  %261 = vmatpush1.msra.mxu0 0.0
  %262 = vmatprep.subr.mxu0 0.0
  %263 = vmatpush1.msra.mxu0 0.0
  %264 = vmatprep.subr.mxu0 0.0
  %265 = vmatpush1.msra.mxu0 0.0
  %266 = vmatprep.subr.mxu0 0.0
  %267 = vmatpush1.msra.mxu0 0.0
  %268 = vmatprep.subr.mxu0 0.0
  %269 = vmatpush1.msra.mxu0 0.0
  %270 = vmatprep.subr.mxu0 0.0
  %271 = vmatpush1.msra.mxu0 0.0
  %272 = vmatprep.subr.mxu0 0.0
  %273 = vmatpush1.msra.mxu0 0.0
  %274 = vmatprep.subr.mxu0 0.0
  %275 = vmatpush1.msra.mxu0 0.0
  %276 = vmatprep.subr.mxu0 0.0
  %277 = vmatpush1.msra.mxu0 0.0
  %278 = vmatprep.subr.mxu0 0.0
  %279 = vmatpush1.msra.mxu0 0.0
  %280 = vmatprep.subr.mxu0 0.0
  %281 = vmatpush1.msra.mxu0 0.0
  %282 = vmatprep.subr.mxu0 0.0
  %283 = vmatpush1.msra.mxu0 0.0
  %284 = vmatprep.subr.mxu0 0.0
  %285 = vmatpush1.msra.mxu0 0.0
  %286 = vmatprep.subr.mxu0 0.0
  %287 = vmatpush1.msra.mxu0 0.0
  %288 = vmatprep.subr.mxu0 0.0
  %289 = vmatpush1.msra.mxu0 0.0
  %290 = vmatprep.subr.mxu0 0.0
  %291 = vmatpush1.msra.mxu0 0.0
  %292 = vmatprep.subr.mxu0 0.0
  %293 = vmatpush1.msra.mxu0 0.0
  %294 = vmatprep.subr.mxu0 0.0
  %295 = vmatpush1.msra.mxu0 0.0
  %296 = vmatprep.subr.mxu0 0.0
  %297 = vmatpush1.msra.mxu0 0.0
  %298 = vmatprep.subr.mxu0 0.0
  %299 = vmatpush1.msra.mxu0 0.0
  %300 = vmatprep.subr.mxu0 0.0
  %301 = vmatpush1.msra.mxu0 0.0
  %302 = vmatprep.subr.mxu0 0.0
  %303 = vmatpush1.msra.mxu0 0.0
  %304 = vmatprep.mubr.f32.mxu0 0.0
  %305 = vmatmul.mubr.f32.gmra.mrb[0].mxu0 %v235
  %v306 = vpop.f32.mrb[0].mxu0
  %v307 = vadd.f32 %v232, %v306
  %v308 = vpop.f32.mrb[0].mxu0
  %309 = vmatprep.mubr.f32.mxu0 0.0
  %310 = vmatmul.mubr.f32.gmra.mrb[0].mxu0 %v238
  %v311 = vpop.f32.mrb[0].mxu0
  %v312 = vadd.f32 %v232, %v311
  %v313 = vpop.f32.mrb[0].mxu0
  %314 = vdwg.mxu0
  %v315 = vtanh.pop %v307
  %v316 = vtanh.pop %v312
  %vm317 = vcmask 31744
  %318 = vst.msk [vmem:[%s7] sm:$0xff] %vm317, %v315
  %319 = vst.msk [vmem:[%s7 + $0x8] sm:$0xff] %vm317, %v316
  // Predicated region
  $region30: #{policy_forward.1} parent=0 // pred_check
    _
  $region31: #{policy_forward.1} parent=0 // pred_check_branch
    %321 = sbr.rel (0) target = $region33
  $region32: #{policy_forward.1} parent=0 // pred_region
    _
  $region33: #{policy_forward.1} parent=0 // pred_fallthru
    _
  // Predicated region
  $region34: #{policy_forward.1} parent=0 // pred_check
    _
  $region35: #{policy_forward.1} parent=0 // pred_check_branch
    %323 = sbr.rel (0) target = $region37
  $region36: #{policy_forward.1} parent=0 // pred_region
    _
  $region37: #{policy_forward.1} parent=0 // pred_fallthru
    _

</llo_original>
